<compile_context>
chip_gen: v7x
topology: tpu7x:2x2x1
jax: 0.10.0
libtpu: 0.0.40
codegen_flags: <defaults>
</compile_context>

<pallas_src>
import jax
import jax.numpy as jnp
from jax.experimental import pallas as pl
from jax.experimental.pallas import tpu as pltpu


def _repeat_kernel(x_ref, o_ref):
    # x_ref: (TH, TW) spatial tile of the single-channel source image.
    # o_ref: (C, TH, TW) tile of the output.
    # Unrolled per-channel store: one input tile live in vregs at a time.
    tile = x_ref[...]
    for c in range(o_ref.shape[0]):
        o_ref[c] = tile


def _pick_tile(extent: int, preferred: int, align: int) -> int:
    """Largest tile <= preferred obeying the TPU (8, 128) block rule.

    If the whole extent fits within `preferred`, use the full extent (a block
    dim equal to the full array dim is always legal).  Otherwise return an
    `align`-multiple tile; Pallas masks the partial last block if `extent` is
    not an exact multiple.
    """
    if extent <= preferred:
        return extent
    return max(align, (preferred // align) * align)


def tensor_repeat(x, num_output_channels: int, *,
                  th_pref: int = 256, tw_pref: int = 512):
    """Pallas equivalent of TensorRepeat(num_output_channels)(x) for 2-D x."""
    H, W = x.shape
    C = num_output_channels

    # Spatial tiling: sublane-align TH (8), lane-align TW (128).
    TH = _pick_tile(H, th_pref, 8)
    TW = _pick_tile(W, tw_pref, 128)

    grid = (pl.cdiv(H, TH), pl.cdiv(W, TW))

    return pl.pallas_call(
        _repeat_kernel,
        out_shape=jax.ShapeDtypeStruct((C, H, W), x.dtype),
        grid=grid,
        in_specs=[pl.BlockSpec((TH, TW), lambda i, j: (i, j))],
        out_specs=pl.BlockSpec((C, TH, TW), lambda i, j: (0, i, j)),
        compiler_params=pltpu.CompilerParams(
            dimension_semantics=("parallel", "parallel"),
        ),
    )(x)


if __name__ == "__main__":
    key = jax.random.PRNGKey(0)
    num_output_channels = 3

    # Case 1: lane-dense small image (W multiple of 128), single tile.
    H1, W1 = 32, 256
    x1 = jax.random.normal(key, (H1, W1), dtype=jnp.float32)
    out1 = jax.block_until_ready(tensor_repeat(x1, num_output_channels))
    ref1 = jnp.broadcast_to(x1[None, :, :], (num_output_channels, H1, W1))
    assert out1.shape == (num_output_channels, H1, W1), out1.shape
    assert out1.dtype == x1.dtype
    assert bool(jnp.array_equal(out1, ref1))

    # Case 2: tiny non-lane-aligned image (falls back to full-extent block).
    H2, W2 = 16, 16
    x2 = jax.random.normal(jax.random.PRNGKey(1), (H2, W2), dtype=jnp.float32)
    out2 = jax.block_until_ready(tensor_repeat(x2, num_output_channels))
    ref2 = jnp.broadcast_to(x2[None, :, :], (num_output_channels, H2, W2))
    assert out2.shape == (num_output_channels, H2, W2), out2.shape
    assert bool(jnp.array_equal(out2, ref2))

    # Case 3: force a multi-tile grid (small preferred tiles) to exercise the
    # spatial-tiled path with aligned (8, 128) blocks.
    out3 = jax.block_until_ready(
        tensor_repeat(x1, num_output_channels, th_pref=8, tw_pref=128))
    assert bool(jnp.array_equal(out3, ref1))

    print("KERNEL_OK")
</pallas_src>

<mosaic_0001>
module attributes {stable_mosaic.version = 11 : i64} {
  func.func @_repeat_kernel(%arg0: i32, %arg1: i32, %arg2: memref<32x256xf32, #tpu.memory_space<vmem>>, %arg3: memref<3x32x256xf32, #tpu.memory_space<vmem>>) attributes {dimension_semantics = [#tpu.dimension_semantics<parallel>, #tpu.dimension_semantics<parallel>], iteration_bounds = array<i64: 1, 1>, scalar_prefetch = 0 : i64, scratch_operands = 0 : i64, tpu.core_type = #tpu.core_type<tc>, window_params = [{transform_indices = @transform_0, window_bounds = array<i64: 32, 256>}, {transform_indices = @transform_1, window_bounds = array<i64: 3, 32, 256>}]} {
    %c0 = arith.constant 0 : index
    %c0_0 = arith.constant 0 : index
    %0 = vector.load %arg2[%c0, %c0_0] : memref<32x256xf32, #tpu.memory_space<vmem>>, vector<32x256xf32>
    %c0_1 = arith.constant 0 : index
    %c0_2 = arith.constant 0 : index
    %c0_3 = arith.constant 0 : index
    %1 = vector.load %arg3[%c0_1, %c0_2, %c0_3] : memref<3x32x256xf32, #tpu.memory_space<vmem>>, vector<1x32x256xf32>
    %2 = vector.shape_cast %1 : vector<1x32x256xf32> to vector<32x256xf32>
    %3 = vector.shape_cast %0 : vector<32x256xf32> to vector<1x32x256xf32>
    tpu.vector_store %arg3[%c0_1, %c0_2, %c0_3], %3 {strides = array<i32>} : memref<3x32x256xf32, #tpu.memory_space<vmem>>, vector<1x32x256xf32>,
    %c1 = arith.constant 1 : index
    %c0_4 = arith.constant 0 : index
    %c0_5 = arith.constant 0 : index
    %4 = vector.load %arg3[%c1, %c0_4, %c0_5] : memref<3x32x256xf32, #tpu.memory_space<vmem>>, vector<1x32x256xf32>
    %5 = vector.shape_cast %4 : vector<1x32x256xf32> to vector<32x256xf32>
    %6 = vector.shape_cast %0 : vector<32x256xf32> to vector<1x32x256xf32>
    tpu.vector_store %arg3[%c1, %c0_4, %c0_5], %6 {strides = array<i32>} : memref<3x32x256xf32, #tpu.memory_space<vmem>>, vector<1x32x256xf32>,
    %c2 = arith.constant 2 : index
    %c0_6 = arith.constant 0 : index
    %c0_7 = arith.constant 0 : index
    %7 = vector.load %arg3[%c2, %c0_6, %c0_7] : memref<3x32x256xf32, #tpu.memory_space<vmem>>, vector<1x32x256xf32>
    %8 = vector.shape_cast %7 : vector<1x32x256xf32> to vector<32x256xf32>
    %9 = vector.shape_cast %0 : vector<32x256xf32> to vector<1x32x256xf32>
    tpu.vector_store %arg3[%c2, %c0_6, %c0_7], %9 {strides = array<i32>} : memref<3x32x256xf32, #tpu.memory_space<vmem>>, vector<1x32x256xf32>,
    return
  }
  func.func @transform_0(%arg0: i32, %arg1: i32) -> (i32, i32) {
    %c0_i32 = arith.constant 0 : i32
    return %arg0, %arg1 : i32, i32
  }
  func.func @transform_1(%arg0: i32, %arg1: i32) -> (i32, i32, i32) {
    %c0_i32 = arith.constant 0 : i32
    %c0_i32_0 = arith.constant 0 : i32
    return %c0_i32, %arg0, %arg1 : i32, i32, i32
  }
}

</mosaic_0001>

<llo_original>
// kernel: tpu_custom_call.1
$region0: #{tpu_custom_call.1}
  #allocation0 [shape = 'u32[]', space=smem, size = 0x4, offset = 0x4, fixed_abs, tag = 'smem constant byte address 0x4 - core index']
  #allocation1 [shape = 'u32[144,128]{1,0:T(1,128)}', space=vmem, size = 0x12000, scoped, tag = 'internal scratch']
  %s0 = inlined_call_operand.hbm [shape: f32[32,256], index: 0, kind: input, shape index: {}]
  %s1 = inlined_call_operand.hbm [shape: f32[3,32,256], index: 1, kind: output, shape index: {}]
  %s2 = sld [smem:[#allocation0]]
  $region18: #{tpu_custom_call.1} parent=0
    _
  %s4 = ssub.s32 1, %s2
  %s5 = scalar_select 0, %s4, %s2
  $region1: #{tpu_custom_call.1} parent=0
    #allocation2 [shape = 'u8[32768]{0}', space=vmem, size = 0x8000, scoped, tag = 'input window, operand 0, single buffered']
    #allocation3 [shape = 's32[1]{0}', space=sflag, size = 0x4, scoped, tag = 'scoped memory for tpu_custom_call.1']
    #allocation4 [shape = 's32[1]{0}', space=sflag, size = 0x4, scoped, tag = 'scoped memory for tpu_custom_call.1']
    #allocation5 [shape = 'u8[98304]{0}', space=vmem, size = 0x18000, scoped, tag = 'output window, operand 0, single buffered']
    %6 = vsyncpa [#allocation3], 0
    %7 = vsyncpa [#allocation4], 0
    // Predicated region
    $region2: #{tpu_custom_call.1} parent=1 // pred_check
      _
    $region3: #{tpu_custom_call.1} parent=1 // pred_check_branch
      %9 = sbr.rel (0) target = $region5
    $region4: #{tpu_custom_call.1} parent=1 // pred_region
      %s11 = ssub.s32 1024, 1024
      %12 = vsyncadd [#allocation3], %s11
      %s13 = sshll.u32 [#allocation2], 4
      %s14 = int_to_ptr.vmem [resolvable:$true] %s13
      %19 = dma.hbm_to_vmem [thread:$0]  %s0, 1024, %s14, [#allocation3], 256, 256, 16
    $region5: #{tpu_custom_call.1} parent=1 // pred_fallthru
      _
    // Predicated region
    $region6: #{tpu_custom_call.1} parent=1 // pred_check
      _
    $region7: #{tpu_custom_call.1} parent=1 // pred_check_branch
      %21 = sbr.rel (0) target = $region9
    $region8: #{tpu_custom_call.1} parent=1 // pred_region
      %22 = dma.done [#allocation3], 1024
    $region9: #{tpu_custom_call.1} parent=1 // pred_fallthru
      _
    %v23 = vld [vmem:[#allocation2] sm:$0xff]
    %v24 = vld [vmem:[#allocation2 + $0x8] sm:$0xff]
    %v25 = vld [vmem:[#allocation2 + $0x10] sm:$0xff]
    %v26 = vld [vmem:[#allocation2 + $0x18] sm:$0xff]
    %v27 = vld [vmem:[#allocation2 + $0x20] sm:$0xff]
    %v28 = vld [vmem:[#allocation2 + $0x28] sm:$0xff]
    %v29 = vld [vmem:[#allocation2 + $0x30] sm:$0xff]
    %v30 = vld [vmem:[#allocation2 + $0x38] sm:$0xff]
    %31 = vst [vmem:[#allocation5] sm:$0xff] %v23
    %32 = vst [vmem:[#allocation5 + $0x8] sm:$0xff] %v24
    %33 = vst [vmem:[#allocation5 + $0x10] sm:$0xff] %v25
    %34 = vst [vmem:[#allocation5 + $0x18] sm:$0xff] %v26
    %35 = vst [vmem:[#allocation5 + $0x20] sm:$0xff] %v27
    %36 = vst [vmem:[#allocation5 + $0x28] sm:$0xff] %v28
    %37 = vst [vmem:[#allocation5 + $0x30] sm:$0xff] %v29
    %38 = vst [vmem:[#allocation5 + $0x38] sm:$0xff] %v30
    %s39 = scalar_lea.vmem [#allocation5], 64
    %40 = vst [vmem:[%s39] sm:$0xff] %v23
    %41 = vst [vmem:[%s39 + $0x8] sm:$0xff] %v24
    %42 = vst [vmem:[%s39 + $0x10] sm:$0xff] %v25
    %43 = vst [vmem:[%s39 + $0x18] sm:$0xff] %v26
    %44 = vst [vmem:[%s39 + $0x20] sm:$0xff] %v27
    %45 = vst [vmem:[%s39 + $0x28] sm:$0xff] %v28
    %46 = vst [vmem:[%s39 + $0x30] sm:$0xff] %v29
    %47 = vst [vmem:[%s39 + $0x38] sm:$0xff] %v30
    %s48 = scalar_lea.vmem [#allocation5], 128
    %49 = vst [vmem:[%s48] sm:$0xff] %v23
    %50 = vst [vmem:[%s48 + $0x8] sm:$0xff] %v24
    %51 = vst [vmem:[%s48 + $0x10] sm:$0xff] %v25
    %52 = vst [vmem:[%s48 + $0x18] sm:$0xff] %v26
    %53 = vst [vmem:[%s48 + $0x20] sm:$0xff] %v27
    %54 = vst [vmem:[%s48 + $0x28] sm:$0xff] %v28
    %55 = vst [vmem:[%s48 + $0x30] sm:$0xff] %v29
    %56 = vst [vmem:[%s48 + $0x38] sm:$0xff] %v30
    // Predicated region
    $region10: #{tpu_custom_call.1} parent=1 // pred_check
      _
    $region11: #{tpu_custom_call.1} parent=1 // pred_check_branch
      %58 = sbr.rel (0) target = $region13
    $region12: #{tpu_custom_call.1} parent=1 // pred_region
      %s60 = ssub.s32 3072, 3072
      %61 = vsyncadd [#allocation4], %s60
      %s62 = sshll.u32 [#allocation5], 4
      %s63 = int_to_ptr.vmem [resolvable:$true] %s62
      %68 = dma.vmem_to_hbm [thread:$0]  %s63, 3072, %s1, [#allocation4], 256, 256, 16
    $region13: #{tpu_custom_call.1} parent=1 // pred_fallthru
      _
    // Predicated region
    $region14: #{tpu_custom_call.1} parent=1 // pred_check
      _
    $region15: #{tpu_custom_call.1} parent=1 // pred_check_branch
      %70 = sbr.rel (0) target = $region17
    $region16: #{tpu_custom_call.1} parent=1 // pred_region
      %71 = dma.done [#allocation4], 3072
    $region17: #{tpu_custom_call.1} parent=1 // pred_fallthru
      _
    %72 = vsyncpa [#allocation3], 1
    %73 = vsyncpa [#allocation4], 1

</llo_original>
